<compile_context>
chip_gen: v7x
topology: tpu7x:2x2x1
jax: 0.10.0
libtpu: 0.0.40
codegen_flags: <defaults>
</compile_context>

<pallas_src>
import functools

import jax
import jax.numpy as jnp
import numpy as np
from jax.experimental import pallas as pl
from jax.experimental.pallas import tpu as pltpu


def _int_pow(v, p):
    """v ** p for a small static positive integer p, fully unrolled (exponentiation by squaring)."""
    result = None
    base = v
    while p:
        if p & 1:
            result = base if result is None else result * base
        p >>= 1
        if p:
            base = base * base
    return result


def _gram(xi, xj):
    # Contract the last axis of both operands: MXU handles the "transposed RHS" natively,
    # no materialized transpose / XLU pass.
    return jax.lax.dot_general(
        xi, xj, dimension_numbers=(((1,), (1,)), ((), ())),
        preferred_element_type=jnp.float32)


def _rbf_block_ladder(scale_ref, xi_ref, xj_ref, sqi_ref, sqj_ref, out_ref, *, n_kernels, ratio):
    """Integer-ratio geometric multiplier ladder: one EUP exp + repeated VPU multiplication.

    scale = -1/(bandwidth * max_mult);  term_k = exp(l2*scale)^(ratio^k).
    """
    gram = _gram(xi_ref[...], xj_ref[...])
    l2 = jnp.maximum(sqi_ref[...] + sqj_ref[...] - 2.0 * gram, 0.0)      # (tm,1)+(1,tn) broadcast
    e = jnp.exp(l2 * scale_ref[0])                                        # single EUP pass
    if ratio == 1:
        out_ref[...] = (e * jnp.float32(n_kernels)).astype(out_ref.dtype)
        return
    acc = e
    for _ in range(n_kernels - 1):
        e = _int_pow(e, ratio)                                            # VPU multiplies only
        acc = acc + e
    out_ref[...] = acc.astype(out_ref.dtype)


def _rbf_block_general(scales_ref, xi_ref, xj_ref, sqi_ref, sqj_ref, out_ref, *, n_kernels):
    """General multipliers: scales_ref[k] = -1/(bandwidth * mult_k), hoisted SMEM scalars."""
    gram = _gram(xi_ref[...], xj_ref[...])
    l2 = jnp.maximum(sqi_ref[...] + sqj_ref[...] - 2.0 * gram, 0.0)
    acc = jnp.exp(l2 * scales_ref[0])
    for k in range(1, n_kernels):
        acc = acc + jnp.exp(l2 * scales_ref[k])
    out_ref[...] = acc.astype(out_ref.dtype)


def rbf_forward(x, *, n_kernels=5, mul_factor=2.0, bandwidth=None,
                tile=512, out_dtype=jnp.float32, matmul_dtype=jnp.float32):
    """Matches RBF.forward: sum_k exp(-cdist(X, X)**2 / (get_bandwidth() * mult_k)).

    n_kernels / mul_factor / bandwidth / tile / dtypes are static Python config (jit-friendly).
    Set matmul_dtype=jnp.bfloat16 for large D, out_dtype=jnp.bfloat16 to halve writeback bytes.
    """
    x = jnp.asarray(x, jnp.float32)
    n, d = x.shape

    # Module parameters are a static host-side property -> decide the kernel at trace time.
    mult_host = np.asarray(mul_factor, np.float64) ** (np.arange(n_kernels) - n_kernels // 2)
    max_mult = float(mult_host.max())

    # Center X: pairwise distances are translation invariant; removes catastrophic cancellation
    # in both the analytic bandwidth and the norm-expansion of the squared distances.
    xc = x - jnp.mean(x, axis=0, keepdims=True)
    row_sq = jnp.sum(xc * xc, axis=-1, keepdims=True)                     # (N, 1) f32

    if bandwidth is None:
        # sum_ij ||xi-xj||^2 = 2*N*sum_i ||xi - mean||^2   (O(N*D), no (N,N) residency)
        # NOTE: like the PyTorch reference, n == 1 or identical rows give inf/nan.
        bw = 2.0 * jnp.float32(n) * jnp.sum(row_sq) / jnp.float32(n * n - n)
    else:
        bw = jnp.float32(bandwidth)

    # Static fast-path selection: integer-ratio geometric ladder -> 1 exp + VPU multiply chain.
    ratio = float(mul_factor)
    int_ladder = abs(ratio - round(ratio)) < 1e-12 and round(ratio) >= 1
    if int_ladder:
        scales = jnp.reshape(-1.0 / (bw * max_mult), (1,)).astype(jnp.float32)
        kernel = functools.partial(_rbf_block_ladder, n_kernels=n_kernels, ratio=int(round(ratio)))
        n_exp = 1
    else:
        scales = (-1.0 / (bw * jnp.asarray(mult_host, jnp.float32))).astype(jnp.float32)
        kernel = functools.partial(_rbf_block_general, n_kernels=n_kernels)
        n_exp = n_kernels

    x_mm = xc.astype(matmul_dtype)
    x_bytes = jnp.dtype(matmul_dtype).itemsize
    out_bytes = jnp.dtype(out_dtype).itemsize

    def vmem_est(t):
        return (2 * 2 * t * d * x_bytes        # double-buffered (t, d) row + col x tiles
                + 2 * 2 * t * 4                # double-buffered norm vectors
                + 2 * t * t * out_bytes        # double-buffered output block
                + 5 * t * t * 4)               # gram / l2 / e / acc f32 temporaries + slack

    if n <= tile:
        # Single full-array block (grid 1x1); block dims equal the array dims so no alignment pad.
        tm = tn = n
        x_rows = x_mm
        sqi = row_sq
        sqj = row_sq.reshape(1, n)
        grid = (1, 1)
    else:
        t = tile
        # Shrink tile if the VMEM working set would overflow a conservative budget
        # (v5e default scoped VMEM is 16 MiB, v7x physical is 64 MiB/TC).
        while t > 128 and vmem_est(t) > 40 * 1024 * 1024:
            t //= 2
        tm = tn = t
        n_pad = pl.cdiv(n, t) * t
        pad = n_pad - n
        # Pad only the cheap (N, D) inputs; the (N, N) output stays unpadded (edge writes clipped).
        x_rows = jnp.pad(x_mm, ((0, pad), (0, 0)))
        sqi = jnp.pad(row_sq, ((0, pad), (0, 0)))
        sqj = sqi.reshape(1, n_pad)
        grid = (n_pad // tm, n_pad // tn)

    vmem_limit = int(min(max(vmem_est(tm) + (8 << 20), 32 << 20), 48 << 20))

    grid_i, grid_j = grid
    n_rows = grid_i * tm
    flops = 2 * n_rows * n_rows * d + (4 + n_kernels) * n_rows * n_rows
    bytes_accessed = (grid_j * n_rows * d * x_bytes       # row tiles re-read per column block
                      + grid_i * n_rows * d * x_bytes     # col tiles re-read per row block
                      + n * n * out_bytes                 # output writeback (unpadded)
                      + 2 * n_rows * 4)                   # norm vectors

    out = pl.pallas_call(
        kernel,
        out_shape=jax.ShapeDtypeStruct((n, n), out_dtype),
        grid=grid,
        in_specs=[
            pl.BlockSpec(memory_space=pltpu.MemorySpace.SMEM),   # -1/(bw*mult) scalars
            pl.BlockSpec((tm, d), lambda i, j: (i, 0)),          # row tile of X
            pl.BlockSpec((tn, d), lambda i, j: (j, 0)),          # col tile of X (contracted on D)
            pl.BlockSpec((tm, 1), lambda i, j: (i, 0)),          # ||x_i||^2 column vector
            pl.BlockSpec((1, tn), lambda i, j: (0, j)),          # ||x_j||^2 row vector (lane-aligned)
        ],
        out_specs=pl.BlockSpec((tm, tn), lambda i, j: (i, j)),
        compiler_params=pltpu.CompilerParams(
            dimension_semantics=("parallel", "parallel"),
            vmem_limit_bytes=vmem_limit),
        cost_estimate=pl.CostEstimate(
            flops=int(flops),
            transcendentals=int(n_exp * n_rows * n_rows),
            bytes_accessed=int(bytes_accessed)),
    )(scales, x_rows, x_rows, sqi, sqj)

    return out


def _reference(x, n_kernels=5, mul_factor=2.0, bandwidth=None):
    mult = (jnp.float32(mul_factor) ** (jnp.arange(n_kernels) - n_kernels // 2)).astype(jnp.float32)
    diff = x[:, None, :] - x[None, :, :]
    l2 = jnp.sum(diff * diff, axis=-1)
    bw = jnp.sum(l2) / (x.shape[0] ** 2 - x.shape[0]) if bandwidth is None else jnp.float32(bandwidth)
    return jnp.exp(-l2[None, ...] / (bw * mult)[:, None, None]).sum(axis=0)


if __name__ == "__main__":
    key = jax.random.PRNGKey(0)
    k1, k2 = jax.random.split(key)

    # Small case: single full-array block (grid 1x1), default pow-2 ladder fast path.
    # Non-zero mean exercises the centered-bandwidth / centered-distance path.
    x_small = jax.random.normal(k1, (8, 32), dtype=jnp.float32) + 3.0
    out_small = jax.block_until_ready(rbf_forward(x_small))
    ref_small = _reference(x_small)
    assert out_small.shape == (8, 8)
    assert jnp.allclose(out_small, ref_small, atol=1e-3, rtol=1e-3), \
        float(jnp.max(jnp.abs(out_small - ref_small)))

    # Non-integer multiplier ladder -> general (per-k exp) kernel.
    out_gen = jax.block_until_ready(rbf_forward(x_small, n_kernels=4, mul_factor=1.5))
    ref_gen = _reference(x_small, n_kernels=4, mul_factor=1.5)
    assert jnp.allclose(out_gen, ref_gen, atol=1e-3, rtol=1e-3), \
        float(jnp.max(jnp.abs(out_gen - ref_gen)))

    # Larger, jitted, tiled case: N=300 with 128-wide tiles -> (3,3) grid, unpadded (300,300)
    # output with clipped edge-block writebacks (fast path still selected under jit).
    x_big = jax.random.normal(k2, (300, 48), dtype=jnp.float32)
    rbf_jit = jax.jit(functools.partial(rbf_forward, tile=128))
    out_big = jax.block_until_ready(rbf_jit(x_big))
    ref_big = _reference(x_big)
    assert out_big.shape == (300, 300)
    assert jnp.allclose(out_big, ref_big, atol=1e-3, rtol=1e-3), \
        float(jnp.max(jnp.abs(out_big - ref_big)))

    print("KERNEL_OK")
</pallas_src>

<mosaic_0001>
module attributes {stable_mosaic.version = 11 : i64} {
  func.func @_rbf_block_ladder(%arg0: i32, %arg1: i32, %arg2: memref<1xf32, #tpu.memory_space<smem>>, %arg3: memref<8x32xf32, #tpu.memory_space<vmem>>, %arg4: memref<8x32xf32, #tpu.memory_space<vmem>>, %arg5: memref<8x1xf32, #tpu.memory_space<vmem>>, %arg6: memref<1x8xf32, #tpu.memory_space<vmem>>, %arg7: memref<8x8xf32, #tpu.memory_space<vmem>>) attributes {dimension_semantics = [#tpu.dimension_semantics<parallel>, #tpu.dimension_semantics<parallel>], iteration_bounds = array<i64: 1, 1>, scalar_prefetch = 0 : i64, scratch_operands = 0 : i64, tpu.core_type = #tpu.core_type<tc>, window_params = [{transform_indices = @transform_0, window_bounds = array<i64: 1>}, {transform_indices = @transform_1, window_bounds = array<i64: 8, 32>}, {transform_indices = @transform_2, window_bounds = array<i64: 8, 32>}, {transform_indices = @transform_3, window_bounds = array<i64: 8, 1>}, {transform_indices = @transform_4, window_bounds = array<i64: 1, 8>}, {transform_indices = @transform_5, window_bounds = array<i64: 8, 8>}]} {
    %c0 = arith.constant 0 : index
    %c0_0 = arith.constant 0 : index
    %0 = vector.load %arg3[%c0, %c0_0] : memref<8x32xf32, #tpu.memory_space<vmem>>, vector<8x32xf32>
    %c0_1 = arith.constant 0 : index
    %c0_2 = arith.constant 0 : index
    %1 = vector.load %arg4[%c0_1, %c0_2] : memref<8x32xf32, #tpu.memory_space<vmem>>, vector<8x32xf32>
    %cst = arith.constant dense<0.000000e+00> : vector<8x8xf32>
    %2 = tpu.matmul %0, %1, %cst {dimension_numbers = #tpu.dot_dimension_numbers<[1], [1], [0], [0], [0, 0, 1, 0], [], []>} : vector<8x32xf32>, vector<8x32xf32>, vector<8x8xf32> -> vector<8x8xf32>
    %c0_3 = arith.constant 0 : index
    %c0_4 = arith.constant 0 : index
    %3 = vector.load %arg5[%c0_3, %c0_4] : memref<8x1xf32, #tpu.memory_space<vmem>>, vector<8x1xf32>
    %c0_5 = arith.constant 0 : index
    %c0_6 = arith.constant 0 : index
    %4 = vector.load %arg6[%c0_5, %c0_6] : memref<1x8xf32, #tpu.memory_space<vmem>>, vector<1x8xf32>
    %5 = vector.broadcast %3 : vector<8x1xf32> to vector<8x8xf32>
    %6 = vector.broadcast %4 : vector<1x8xf32> to vector<8x8xf32>
    %7 = arith.addf %5, %6 : vector<8x8xf32>
    %cst_7 = arith.constant 2.000000e+00 : f32
    %8 = vector.broadcast %cst_7 : f32 to vector<8x8xf32>
    %9 = arith.mulf %8, %2 : vector<8x8xf32>
    %10 = arith.subf %7, %9 : vector<8x8xf32>
    %cst_8 = arith.constant 0.000000e+00 : f32
    %11 = vector.broadcast %cst_8 : f32 to vector<8x8xf32>
    %12 = arith.maximumf %10, %11 : vector<8x8xf32>
    %c0_9 = arith.constant 0 : index
    %13 = memref.load %arg2[%c0_9] : memref<1xf32, #tpu.memory_space<smem>>
    %14 = vector.broadcast %13 : f32 to vector<8x8xf32>
    %15 = arith.mulf %12, %14 : vector<8x8xf32>
    %16 = math.exp %15 : vector<8x8xf32>
    %17 = arith.mulf %16, %16 : vector<8x8xf32>
    %18 = arith.addf %16, %17 : vector<8x8xf32>
    %19 = arith.mulf %17, %17 : vector<8x8xf32>
    %20 = arith.addf %18, %19 : vector<8x8xf32>
    %21 = arith.mulf %19, %19 : vector<8x8xf32>
    %22 = arith.addf %20, %21 : vector<8x8xf32>
    %23 = arith.mulf %21, %21 : vector<8x8xf32>
    %24 = arith.addf %22, %23 : vector<8x8xf32>
    %c0_10 = arith.constant 0 : index
    %c0_11 = arith.constant 0 : index
    %25 = vector.load %arg7[%c0_10, %c0_11] : memref<8x8xf32, #tpu.memory_space<vmem>>, vector<8x8xf32>
    tpu.vector_store %arg7[%c0_10, %c0_11], %24 {strides = array<i32>} : memref<8x8xf32, #tpu.memory_space<vmem>>, vector<8x8xf32>,
    return
  }
  func.func @transform_0(%arg0: i32, %arg1: i32) -> i32 {
    %c0_i32 = arith.constant 0 : i32
    %c0_i32_0 = arith.constant 0 : i32
    return %c0_i32 : i32
  }
  func.func @transform_1(%arg0: i32, %arg1: i32) -> (i32, i32) {
    %c0_i32 = arith.constant 0 : i32
    %c0_i32_0 = arith.constant 0 : i32
    return %arg0, %c0_i32 : i32, i32
  }
  func.func @transform_2(%arg0: i32, %arg1: i32) -> (i32, i32) {
    %c0_i32 = arith.constant 0 : i32
    %c0_i32_0 = arith.constant 0 : i32
    return %arg1, %c0_i32 : i32, i32
  }
  func.func @transform_3(%arg0: i32, %arg1: i32) -> (i32, i32) {
    %c0_i32 = arith.constant 0 : i32
    %c0_i32_0 = arith.constant 0 : i32
    return %arg0, %c0_i32 : i32, i32
  }
  func.func @transform_4(%arg0: i32, %arg1: i32) -> (i32, i32) {
    %c0_i32 = arith.constant 0 : i32
    %c0_i32_0 = arith.constant 0 : i32
    return %c0_i32, %arg1 : i32, i32
  }
  func.func @transform_5(%arg0: i32, %arg1: i32) -> (i32, i32) {
    %c0_i32 = arith.constant 0 : i32
    return %arg0, %arg1 : i32, i32
  }
}

</mosaic_0001>

<llo_original>
// kernel: tpu_custom_call.1
$region0: #{tpu_custom_call.1}
  #allocation0 [shape = 'u32[]', space=smem, size = 0x4, offset = 0x4, fixed_abs, tag = 'smem constant byte address 0x4 - core index']
  #allocation1 [shape = 'u32[144,128]{1,0:T(1,128)}', space=vmem, size = 0x12000, scoped, tag = 'internal scratch']
  #allocation2 [shape = 'f32[1]{0:T(128)S(6)}', space=smem, size = 0x200, scoped, tag = 'scoped memory for tpu_custom_call.1']
  %s0 = inlined_call_operand.<no memory space> [shape: f32[1], index: 0, kind: input, shape index: {}]
  %s1 = inlined_call_operand.vmem [shape: f32[8,32], index: 1, kind: input, shape index: {}]
  %s2 = inlined_call_operand.vmem [shape: f32[8,32], index: 2, kind: input, shape index: {}]
  %s3 = inlined_call_operand.vmem [shape: f32[8,1], index: 3, kind: input, shape index: {}]
  %s4 = inlined_call_operand.vmem [shape: f32[1,8], index: 4, kind: input, shape index: {}]
  %s5 = inlined_call_operand.hbm [shape: f32[8,8], index: 5, kind: output, shape index: {}]
  %s6 = sld [smem:[#allocation0]]
  $region30: #{tpu_custom_call.1} parent=0
    _
  %s8 = ssub.s32 1, %s6
  %s9 = scalar_select 0, %s8, %s6
  %10 = sst [smem:[#allocation2]] %s0
  $region1: #{tpu_custom_call.1} parent=0
    #allocation3 [shape = 'u8[4096]{0}', space=vmem, size = 0x1000, scoped, tag = 'output window, operand 0, single buffered']
    #allocation4 [shape = 's32[1]{0}', space=sflag, size = 0x4, scoped, tag = 'scoped memory for tpu_custom_call.1']
    %11 = vsyncpa [#allocation4], 0
    // Predicated region
    $region2: #{tpu_custom_call.1} parent=1 // pred_check
      _
    $region3: #{tpu_custom_call.1} parent=1 // pred_check_branch
      %13 = sbr.rel (0) target = $region5
    $region4: #{tpu_custom_call.1} parent=1 // pred_region
      _
    $region5: #{tpu_custom_call.1} parent=1 // pred_fallthru
      _
    // Predicated region
    $region6: #{tpu_custom_call.1} parent=1 // pred_check
      _
    $region7: #{tpu_custom_call.1} parent=1 // pred_check_branch
      %15 = sbr.rel (0) target = $region9
    $region8: #{tpu_custom_call.1} parent=1 // pred_region
      _
    $region9: #{tpu_custom_call.1} parent=1 // pred_fallthru
      _
    // Predicated region
    $region10: #{tpu_custom_call.1} parent=1 // pred_check
      _
    $region11: #{tpu_custom_call.1} parent=1 // pred_check_branch
      %17 = sbr.rel (0) target = $region13
    $region12: #{tpu_custom_call.1} parent=1 // pred_region
      _
    $region13: #{tpu_custom_call.1} parent=1 // pred_fallthru
      _
    // Predicated region
    $region14: #{tpu_custom_call.1} parent=1 // pred_check
      _
    $region15: #{tpu_custom_call.1} parent=1 // pred_check_branch
      %19 = sbr.rel (0) target = $region17
    $region16: #{tpu_custom_call.1} parent=1 // pred_region
      _
    $region17: #{tpu_custom_call.1} parent=1 // pred_fallthru
      _
    // Predicated region
    $region18: #{tpu_custom_call.1} parent=1 // pred_check
      _
    $region19: #{tpu_custom_call.1} parent=1 // pred_check_branch
      %21 = sbr.rel (0) target = $region21
    $region20: #{tpu_custom_call.1} parent=1 // pred_region
      _
    $region21: #{tpu_custom_call.1} parent=1 // pred_fallthru
      _
    %v22 = vld [vmem:[%s1] sm:$0xff]
    %v23 = vld [vmem:[%s2] sm:$0xff]
    %vm24 = vcmask 261120
    %v26 = vsel %vm24, %v22, 0
    %v29 = vsel %vm24, %v23, 0
    %31 = vmatprep.subr.mxu0 0.0
    %32 = vmatpush1.xpose.msra.mxu0 %v29
    %33 = vmatprep.subr.mxu0 0.0
    %34 = vmatpush1.xpose.msra.mxu0 0.0
    %35 = vmatprep.subr.mxu0 0.0
    %36 = vmatpush1.xpose.msra.mxu0 0.0
    %37 = vmatprep.subr.mxu0 0.0
    %38 = vmatpush1.xpose.msra.mxu0 0.0
    %39 = vmatprep.subr.mxu0 0.0
    %40 = vmatpush1.xpose.msra.mxu0 0.0
    %41 = vmatprep.subr.mxu0 0.0
    %42 = vmatpush1.xpose.msra.mxu0 0.0
    %43 = vmatprep.subr.mxu0 0.0
    %44 = vmatpush1.xpose.msra.mxu0 0.0
    %45 = vmatprep.subr.mxu0 0.0
    %46 = vmatpush1.xpose.msra.mxu0 0.0
    %47 = vmatprep.subr.mxu0 0.0
    %48 = vmatpush1.xpose.msra.mxu0 0.0
    %49 = vmatprep.subr.mxu0 0.0
    %50 = vmatpush1.xpose.msra.mxu0 0.0
    %51 = vmatprep.subr.mxu0 0.0
    %52 = vmatpush1.xpose.msra.mxu0 0.0
    %53 = vmatprep.subr.mxu0 0.0
    %54 = vmatpush1.xpose.msra.mxu0 0.0
    %55 = vmatprep.subr.mxu0 0.0
    %56 = vmatpush1.xpose.msra.mxu0 0.0
    %57 = vmatprep.subr.mxu0 0.0
    %58 = vmatpush1.xpose.msra.mxu0 0.0
    %59 = vmatprep.subr.mxu0 0.0
    %60 = vmatpush1.xpose.msra.mxu0 0.0
    %61 = vmatprep.subr.mxu0 0.0
    %62 = vmatpush1.xpose.msra.mxu0 0.0
    %63 = vmatprep.subr.mxu0 0.0
    %64 = vmatpush1.xpose.msra.mxu0 0.0
    %65 = vmatprep.subr.mxu0 0.0
    %66 = vmatpush1.xpose.msra.mxu0 0.0
    %67 = vmatprep.subr.mxu0 0.0
    %68 = vmatpush1.xpose.msra.mxu0 0.0
    %69 = vmatprep.subr.mxu0 0.0
    %70 = vmatpush1.xpose.msra.mxu0 0.0
    %71 = vmatprep.subr.mxu0 0.0
    %72 = vmatpush1.xpose.msra.mxu0 0.0
    %73 = vmatprep.subr.mxu0 0.0
    %74 = vmatpush1.xpose.msra.mxu0 0.0
    %75 = vmatprep.subr.mxu0 0.0
    %76 = vmatpush1.xpose.msra.mxu0 0.0
    %77 = vmatprep.subr.mxu0 0.0
    %78 = vmatpush1.xpose.msra.mxu0 0.0
    %79 = vmatprep.subr.mxu0 0.0
    %80 = vmatpush1.xpose.msra.mxu0 0.0
    %81 = vmatprep.subr.mxu0 0.0
    %82 = vmatpush1.xpose.msra.mxu0 0.0
    %83 = vmatprep.subr.mxu0 0.0
    %84 = vmatpush1.xpose.msra.mxu0 0.0
    %85 = vmatprep.subr.mxu0 0.0
    %86 = vmatpush1.xpose.msra.mxu0 0.0
    %87 = vmatprep.subr.mxu0 0.0
    %88 = vmatpush1.xpose.msra.mxu0 0.0
    %89 = vmatprep.subr.mxu0 0.0
    %90 = vmatpush1.xpose.msra.mxu0 0.0
    %91 = vmatprep.subr.mxu0 0.0
    %92 = vmatpush1.xpose.msra.mxu0 0.0
    %93 = vmatprep.subr.mxu0 0.0
    %94 = vmatpush1.xpose.msra.mxu0 0.0
    %95 = vmatprep.mubr.f32.mxu0 0.0
    %96 = vmatmul.mubr.f32.gmra.mrb[0].mxu0 %v26
    %v97 = vpop.f32.mrb[0].mxu0
    %v98 = vadd.f32 0.0, %v97
    %v99 = vpop.f32.mrb[0].mxu0
    %100 = vdwg.mxu0
    %v101 = vld [vmem:[%s3] sm:$0xff]
    %v102 = vld [vmem:[%s4] sm:$0x1]
    %104 = vset.pattern.permute.xlu0 0
    %105 = vperm.xlu0 %104, %v101
    %v106 = vpop.permute.xlu0 %105
    %v109 = vlaneseq
    %v110 = vshrl.u32 %v109, 7
    %v111 = vsub.s32 0, %v110
    %v112 = vrot.slane %v102, %v111
    %v114 = vadd.f32 %v106, %v112
    %v115 = vmul.f32 %v98, 2.0
    %v116 = vsub.f32 %v114, %v115
    %v117 = vmax.f32 %v116, 0.0
    %s118 = sld [smem:[#allocation2]]
    %v119 = vstv %s118
    %v120 = vmul.f32 %v117, %v119
    %v121 = vmul.f32 %v120, 1.442695
    %v122 = vpow.pop %v121
    %v123 = vmul.f32 %v122, %v122
    %v124 = vadd.f32 %v122, %v123
    %v125 = vmul.f32 %v123, %v123
    %v126 = vadd.f32 %v124, %v125
    %v127 = vmul.f32 %v125, %v125
    %v128 = vadd.f32 %v126, %v127
    %v129 = vmul.f32 %v127, %v127
    %v130 = vadd.f32 %v128, %v129
    %vm131 = vcmask 64512
    %132 = vst.msk [vmem:[#allocation3] sm:$0xff] %vm131, %v130
    // Predicated region
    $region22: #{tpu_custom_call.1} parent=1 // pred_check
      _
    $region23: #{tpu_custom_call.1} parent=1 // pred_check_branch
      %134 = sbr.rel (0) target = $region25
    $region24: #{tpu_custom_call.1} parent=1 // pred_region
      %s136 = ssub.s32 128, 128
      %137 = vsyncadd [#allocation4], %s136
      %s139 = sshll.u32 [#allocation3], 4
      %s140 = int_to_ptr.vmem [resolvable:$true] %s139
      %142 = dma.vmem_to_hbm [thread:$0]  %s140, 128, %s5, [#allocation4]
    $region25: #{tpu_custom_call.1} parent=1 // pred_fallthru
      _
    // Predicated region
    $region26: #{tpu_custom_call.1} parent=1 // pred_check
      _
    $region27: #{tpu_custom_call.1} parent=1 // pred_check_branch
      %144 = sbr.rel (0) target = $region29
    $region28: #{tpu_custom_call.1} parent=1 // pred_region
      %145 = dma.done [#allocation4], 128
    $region29: #{tpu_custom_call.1} parent=1 // pred_fallthru
      _
    %146 = vsyncpa [#allocation4], 1

</llo_original>
